<compile_context>
chip_gen: v6e
topology: v6e:2x2x1
jax: 0.10.0
libtpu: 0.0.40
codegen_flags: <defaults>
</compile_context>

<pallas_src>
import math

import jax
import jax.numpy as jnp
from jax import lax
from jax.experimental import pallas as pl
from jax.experimental.pallas import tpu as pltpu

ACT_N_BITS = 8
QMIN = float(-(2 ** (ACT_N_BITS - 1)))      # -128
QMAX = float(2 ** (ACT_N_BITS - 1) - 1)     # 127

# Activation-quantizer slots (one delta per fake-quant module in the reference).
IDX_IH, IDX_HH, IDX_ADD0 = 0, 1, 2
IDX_SIG0, IDX_SIG1, IDX_TANH0, IDX_SIG2 = 3, 4, 5, 6
IDX_MUL0, IDX_MUL1, IDX_ADD1 = 7, 8, 9
IDX_TANH1, IDX_MUL2, IDX_OUT = 10, 11, 12

# Deterministic per-quantizer thresholds (stand-in for the learned LSQ params).
_ACT_THRESHOLDS = [
    4.0,  # ih
    4.0,  # hh
    4.0,  # add0 (gates pre-activation)
    1.0,  # sig0
    1.0,  # sig1
    1.0,  # tanh0
    1.0,  # sig2
    1.0,  # mul0
    1.0,  # mul1
    4.0,  # add1 (cell state)
    1.0,  # tanh1
    1.0,  # mul2 (hidden state)
    1.0,  # out
]
# Baked compile-time deltas / inverse deltas (Mosaic folds these to immediates).
_DELTAS = [t / (2.0 ** (ACT_N_BITS - 1)) for t in _ACT_THRESHOLDS]
_INV_DELTAS = [1.0 / d for d in _DELTAS]


def _fq(v, idx):
    """Symmetric uniform activation fake-quant with compile-time scale."""
    return jnp.clip(jnp.round(v * _INV_DELTAS[idx]), QMIN, QMAX) * _DELTAS[idx]


def _sigmoid(v):
    # tanh reformulation of the logistic: mathematically identical to
    # torch.sigmoid, but lowers to the EUP tanh unit instead of a VALU divide.
    return 0.5 * (jnp.tanh(0.5 * v) + 1.0)


def _weight_fake_quant(w, n_bits=8):
    # Per-tensor symmetric weight fake-quant (deterministic max-abs scale).
    qmax = 2.0 ** (n_bits - 1) - 1
    delta = jnp.maximum(jnp.max(jnp.abs(w)), 1e-8) / qmax
    return jnp.clip(jnp.round(w / delta), -qmax - 1.0, qmax) * delta


# --------------------------------------------------------------------------
# Pass 1 (parallel): ih = FQ_ih(x @ Wih^T + b_ih) for all timesteps at once.
# --------------------------------------------------------------------------
def _ih_prepass_kernel(x_ref, wih_ref, bih_ref, ih_ref):
    acc = jnp.dot(x_ref[...], wih_ref[...], preferred_element_type=jnp.float32)
    ih_ref[...] = _fq(acc + bih_ref[...], IDX_IH)


# --------------------------------------------------------------------------
# Pass 2 (sequential recurrence): Tc timesteps per grid step, h/c in scratch.
# --------------------------------------------------------------------------
def _lstmq_recurrent_kernel(ih_ref, whh_ref, bhh_ref, y_ref, h_sc, c_sc):
    @pl.when(pl.program_id(0) == 0)
    def _():
        h_sc[...] = jnp.zeros_like(h_sc)
        c_sc[...] = jnp.zeros_like(c_sc)

    H = h_sc.shape[1]
    Tc = ih_ref.shape[0]
    whh = whh_ref[...]           # resident (H, 4H)
    bhh = bhh_ref[...]           # resident (1, 4H)

    def step(t, carry):
        h, c = carry
        hh = _fq(jnp.dot(h, whh, preferred_element_type=jnp.float32) + bhh,
                 IDX_HH)
        gates = _fq(ih_ref[t] + hh, IDX_ADD0)          # (B_pad, 4H) lane-dense

        # Full-width transcendentals (single EUP call each), then per-gate FQ.
        sig = _sigmoid(gates)
        tnh = jnp.tanh(gates)
        g_i = _fq(sig[:, 0 * H:1 * H], IDX_SIG0)
        g_f = _fq(sig[:, 1 * H:2 * H], IDX_SIG1)
        g_g = _fq(tnh[:, 2 * H:3 * H], IDX_TANH0)
        g_o = _fq(sig[:, 3 * H:4 * H], IDX_SIG2)

        c_new = _fq(_fq(g_f * c, IDX_MUL0) + _fq(g_i * g_g, IDX_MUL1), IDX_ADD1)
        h_new = _fq(g_o * _fq(jnp.tanh(c_new), IDX_TANH1), IDX_MUL2)

        y_ref[t] = _fq(h_new, IDX_OUT).astype(y_ref.dtype)
        return h_new, c_new

    h, c = lax.fori_loop(0, Tc, step, (h_sc[...], c_sc[...]), unroll=True)
    h_sc[...] = h
    c_sc[...] = c


def lstmq_forward(x, Wih, Whh, bih, bhh, *, batch_first=False, time_chunk=8):
    """LSTMQ_full_quantized.forward (unidirectional, 1 layer). Returns [y]."""
    if batch_first:
        x = jnp.transpose(x, (1, 0, 2))
    x = x.astype(jnp.float32)
    T, B, I = x.shape
    H4 = Wih.shape[0]
    H = H4 // 4

    # Weight fake-quant (weight_quant=True) + pre-transpose for x @ W^T.
    wih_t = _weight_fake_quant(Wih).astype(jnp.float32).T       # (I, 4H)
    whh_t = _weight_fake_quant(Whh).astype(jnp.float32).T       # (H, 4H)
    bih2 = bih.reshape(1, H4).astype(jnp.float32)
    bhh2 = bhh.reshape(1, H4).astype(jnp.float32)

    # Pad batch to a full sublane group (8) and time to a chunk multiple.
    B_pad = ((B + 7) // 8) * 8
    Tc = min(time_chunk, T)
    T_pad = ((T + Tc - 1) // Tc) * Tc
    x_p = jnp.zeros((T_pad, B_pad, I), jnp.float32).at[:T, :B].set(x)

    # ---- Pass 1: batched input projection (no recurrent dependence). ----
    rows = T_pad * B_pad
    mb = Tc * B_pad                                             # rows per block
    ih2d = pl.pallas_call(
        _ih_prepass_kernel,
        out_shape=jax.ShapeDtypeStruct((rows, H4), jnp.float32),
        grid=(rows // mb,),
        in_specs=[
            pl.BlockSpec((mb, I), lambda m: (m, 0)),            # x rows
            pl.BlockSpec((I, H4), lambda m: (0, 0)),            # Wih^T resident
            pl.BlockSpec((1, H4), lambda m: (0, 0)),            # b_ih resident
        ],
        out_specs=pl.BlockSpec((mb, H4), lambda m: (m, 0)),     # lane-dense 4H
        compiler_params=pltpu.CompilerParams(
            dimension_semantics=("parallel",)),
    )(x_p.reshape(rows, I), wih_t, bih2)
    ih = ih2d.reshape(T_pad, B_pad, H4)

    # ---- Pass 2: sequential recurrence, Tc timesteps per grid step. ----
    y_p = pl.pallas_call(
        _lstmq_recurrent_kernel,
        out_shape=jax.ShapeDtypeStruct((T_pad, B_pad, H), jnp.float32),
        grid=(T_pad // Tc,),
        in_specs=[
            pl.BlockSpec((Tc, B_pad, H4), lambda c: (c, 0, 0)),  # ih chunk
            pl.BlockSpec((H, H4), lambda c: (0, 0)),             # Whh^T resident
            pl.BlockSpec((1, H4), lambda c: (0, 0)),             # b_hh resident
        ],
        out_specs=pl.BlockSpec((Tc, B_pad, H), lambda c: (c, 0, 0)),
        scratch_shapes=[pltpu.VMEM((B_pad, H), jnp.float32),     # h state
                        pltpu.VMEM((B_pad, H), jnp.float32)],    # c state
        compiler_params=pltpu.CompilerParams(
            dimension_semantics=("arbitrary",)),                 # recurrence
    )(ih, whh_t, bhh2)

    y = y_p[:T, :B]
    if batch_first:
        y = jnp.transpose(y, (1, 0, 2))
    return [y]


def _reference(x, Wih, Whh, bih, bhh):
    """Pure-JAX replica of the PyTorch forward (same quantizer math)."""
    x = x.astype(jnp.float32)
    T, B, _ = x.shape
    H = Whh.shape[1]
    wih_q = _weight_fake_quant(Wih).astype(jnp.float32)
    whh_q = _weight_fake_quant(Whh).astype(jnp.float32)

    h = jnp.zeros((B, H), jnp.float32)
    c = jnp.zeros((B, H), jnp.float32)
    ys = []
    hi = jax.lax.Precision.HIGHEST
    for t in range(T):
        ih = _fq(jnp.dot(x[t], wih_q.T, precision=hi) + bih, IDX_IH)
        hh = _fq(jnp.dot(h, whh_q.T, precision=hi) + bhh, IDX_HH)
        gates = _fq(ih + hh, IDX_ADD0)
        g_i = _fq(_sigmoid(gates[:, 0 * H:1 * H]), IDX_SIG0)
        g_f = _fq(_sigmoid(gates[:, 1 * H:2 * H]), IDX_SIG1)
        g_g = _fq(jnp.tanh(gates[:, 2 * H:3 * H]), IDX_TANH0)
        g_o = _fq(_sigmoid(gates[:, 3 * H:4 * H]), IDX_SIG2)
        c = _fq(_fq(g_f * c, IDX_MUL0) + _fq(g_i * g_g, IDX_MUL1), IDX_ADD1)
        h = _fq(g_o * _fq(jnp.tanh(c), IDX_TANH1), IDX_MUL2)
        ys.append(h)
    y = jnp.stack(ys, axis=0)
    return _fq(y, IDX_OUT)


if __name__ == "__main__":
    key = jax.random.PRNGKey(0)
    k1, k2, k3, k4, k5 = jax.random.split(key, 5)

    # seq=8, batch=2, input=32, hidden=32  (4H = 128 -> lane-dense gates)
    T, B, I, H = 8, 2, 32, 32
    scale = 1.0 / math.sqrt(H)
    x = jax.random.normal(k1, (T, B, I), dtype=jnp.float32)
    Wih = jax.random.normal(k2, (4 * H, I), dtype=jnp.float32) * scale
    Whh = jax.random.normal(k3, (4 * H, H), dtype=jnp.float32) * scale
    bih = jax.random.normal(k4, (4 * H,), dtype=jnp.float32) * 0.1
    bhh = jax.random.normal(k5, (4 * H,), dtype=jnp.float32) * 0.1

    out = lstmq_forward(x, Wih, Whh, bih, bhh)
    y = jax.block_until_ready(out[0])

    ref = _reference(x, Wih, Whh, bih, bhh)
    assert y.shape == ref.shape, (y.shape, ref.shape)
    # Tolerance allows the occasional 1-LSB round flip from transcendental /
    # matmul-accumulation differences between Mosaic and XLA.
    max_err = float(jnp.max(jnp.abs(y - ref)))
    assert max_err < 0.05, max_err

    print("KERNEL_OK")
</pallas_src>

<mosaic_0001>
module attributes {stable_mosaic.version = 11 : i64} {
  func.func @_ih_prepass_kernel(%arg0: i32, %arg1: memref<64x32xf32, #tpu.memory_space<vmem>>, %arg2: memref<32x128xf32, #tpu.memory_space<vmem>>, %arg3: memref<1x128xf32, #tpu.memory_space<vmem>>, %arg4: memref<64x128xf32, #tpu.memory_space<vmem>>) attributes {dimension_semantics = [#tpu.dimension_semantics<parallel>], iteration_bounds = array<i64: 1>, scalar_prefetch = 0 : i64, scratch_operands = 0 : i64, tpu.core_type = #tpu.core_type<tc>, window_params = [{transform_indices = @transform_0, window_bounds = array<i64: 64, 32>}, {pipeline_mode = #tpu.pipeline_mode<synchronous>, transform_indices = @transform_1, window_bounds = array<i64: 32, 128>}, {pipeline_mode = #tpu.pipeline_mode<synchronous>, transform_indices = @transform_2, window_bounds = array<i64: 1, 128>}, {transform_indices = @transform_3, window_bounds = array<i64: 64, 128>}]} {
    %c0 = arith.constant 0 : index
    %c0_0 = arith.constant 0 : index
    %0 = vector.load %arg1[%c0, %c0_0] : memref<64x32xf32, #tpu.memory_space<vmem>>, vector<64x32xf32>
    %c0_1 = arith.constant 0 : index
    %c0_2 = arith.constant 0 : index
    %1 = vector.load %arg2[%c0_1, %c0_2] : memref<32x128xf32, #tpu.memory_space<vmem>>, vector<32x128xf32>
    %cst = arith.constant dense<0.000000e+00> : vector<64x128xf32>
    %2 = tpu.matmul %0, %1, %cst {dimension_numbers = #tpu.dot_dimension_numbers<[1], [0], [0], [1], [0, 0, 1, 1], [], []>} : vector<64x32xf32>, vector<32x128xf32>, vector<64x128xf32> -> vector<64x128xf32>
    %c0_3 = arith.constant 0 : index
    %c0_4 = arith.constant 0 : index
    %3 = vector.load %arg3[%c0_3, %c0_4] : memref<1x128xf32, #tpu.memory_space<vmem>>, vector<1x128xf32>
    %4 = vector.broadcast %3 : vector<1x128xf32> to vector<64x128xf32>
    %5 = arith.addf %2, %4 : vector<64x128xf32>
    %cst_5 = arith.constant 3.200000e+01 : f32
    %6 = vector.broadcast %cst_5 : f32 to vector<64x128xf32>
    %7 = arith.mulf %5, %6 : vector<64x128xf32>
    %8 = math.roundeven %7 : vector<64x128xf32>
    %cst_6 = arith.constant -1.280000e+02 : f32
    %cst_7 = arith.constant 1.270000e+02 : f32
    %9 = vector.broadcast %cst_6 : f32 to vector<64x128xf32>
    %10 = arith.maximumf %9, %8 : vector<64x128xf32>
    %11 = vector.broadcast %cst_7 : f32 to vector<64x128xf32>
    %12 = arith.minimumf %11, %10 : vector<64x128xf32>
    %cst_8 = arith.constant 3.125000e-02 : f32
    %13 = vector.broadcast %cst_8 : f32 to vector<64x128xf32>
    %14 = arith.mulf %12, %13 : vector<64x128xf32>
    %c0_9 = arith.constant 0 : index
    %c0_10 = arith.constant 0 : index
    %15 = vector.load %arg4[%c0_9, %c0_10] : memref<64x128xf32, #tpu.memory_space<vmem>>, vector<64x128xf32>
    tpu.vector_store %arg4[%c0_9, %c0_10], %14 {strides = array<i32>} : memref<64x128xf32, #tpu.memory_space<vmem>>, vector<64x128xf32>,
    return
  }
  func.func @transform_0(%arg0: i32) -> (i32, i32) {
    %c0_i32 = arith.constant 0 : i32
    %c0_i32_0 = arith.constant 0 : i32
    return %arg0, %c0_i32 : i32, i32
  }
  func.func @transform_1(%arg0: i32) -> (i32, i32) {
    %c0_i32 = arith.constant 0 : i32
    %c0_i32_0 = arith.constant 0 : i32
    %c0_i32_1 = arith.constant 0 : i32
    return %c0_i32, %c0_i32_0 : i32, i32
  }
  func.func @transform_2(%arg0: i32) -> (i32, i32) {
    %c0_i32 = arith.constant 0 : i32
    %c0_i32_0 = arith.constant 0 : i32
    %c0_i32_1 = arith.constant 0 : i32
    return %c0_i32, %c0_i32_0 : i32, i32
  }
  func.func @transform_3(%arg0: i32) -> (i32, i32) {
    %c0_i32 = arith.constant 0 : i32
    %c0_i32_0 = arith.constant 0 : i32
    return %arg0, %c0_i32 : i32, i32
  }
}

</mosaic_0001>

<llo_original>
// kernel: tpu_custom_call.1
$region0: #{tpu_custom_call.1}
  #allocation0 [shape = 'u32[]', space=smem, size = 0x4, offset = 0x4, fixed_abs, tag = 'smem constant byte address 0x4 - core index']
  #allocation1 [shape = 'u32[144,128]{1,0:T(1,128)}', space=vmem, size = 0x12000, scoped, tag = 'internal scratch']
  %s0 = inlined_call_operand.vmem [shape: f32[64,32], index: 0, kind: input, shape index: {}]
  %s1 = inlined_call_operand.vmem [shape: f32[32,128], index: 1, kind: input, shape index: {}]
  %s2 = inlined_call_operand.vmem [shape: f32[1,128], index: 2, kind: input, shape index: {}]
  %s3 = inlined_call_operand.hbm [shape: f32[64,128], index: 3, kind: output, shape index: {}]
  %s4 = sld [smem:[#allocation0]]
  $region22: #{tpu_custom_call.1} parent=0
    _
  %s6 = ssub.s32 1, %s4
  %s7 = scalar_select 0, %s6, %s4
  $region1: #{tpu_custom_call.1} parent=0
    #allocation2 [shape = 'u8[32768]{0}', space=vmem, size = 0x8000, scoped, tag = 'output window, operand 0, single buffered']
    #allocation3 [shape = 's32[1]{0}', space=sflag, size = 0x4, scoped, tag = 'scoped memory for tpu_custom_call.1']
    %8 = vsyncpa [#allocation3], 0
    // Predicated region
    $region2: #{tpu_custom_call.1} parent=1 // pred_check
      _
    $region3: #{tpu_custom_call.1} parent=1 // pred_check_branch
      %10 = sbr.rel (0) target = $region5
    $region4: #{tpu_custom_call.1} parent=1 // pred_region
      _
    $region5: #{tpu_custom_call.1} parent=1 // pred_fallthru
      _
    // Predicated region
    $region6: #{tpu_custom_call.1} parent=1 // pred_check
      _
    $region7: #{tpu_custom_call.1} parent=1 // pred_check_branch
      %12 = sbr.rel (0) target = $region9
    $region8: #{tpu_custom_call.1} parent=1 // pred_region
      _
    $region9: #{tpu_custom_call.1} parent=1 // pred_fallthru
      _
    // Predicated region
    $region10: #{tpu_custom_call.1} parent=1 // pred_check
      _
    $region11: #{tpu_custom_call.1} parent=1 // pred_check_branch
      %14 = sbr.rel (0) target = $region13
    $region12: #{tpu_custom_call.1} parent=1 // pred_region
      _
    $region13: #{tpu_custom_call.1} parent=1 // pred_fallthru
      _
    %v15 = vld [vmem:[%s0] sm:$0xff]
    %v16 = vld [vmem:[%s0 + $0x8] sm:$0xff]
    %v17 = vld [vmem:[%s0 + $0x10] sm:$0xff]
    %v18 = vld [vmem:[%s0 + $0x18] sm:$0xff]
    %v19 = vld [vmem:[%s0 + $0x20] sm:$0xff]
    %v20 = vld [vmem:[%s0 + $0x28] sm:$0xff]
    %v21 = vld [vmem:[%s0 + $0x30] sm:$0xff]
    %v22 = vld [vmem:[%s0 + $0x38] sm:$0xff]
    %v23 = vld [vmem:[%s1] sm:$0xff]
    %v24 = vld [vmem:[%s1 + $0x8] sm:$0xff]
    %v25 = vld [vmem:[%s1 + $0x10] sm:$0xff]
    %v26 = vld [vmem:[%s1 + $0x18] sm:$0xff]
    %v27 = vld [vmem:[%s2] sm:$0x1]
    %v29 = vlaneseq
    %v30 = vshrl.u32 %v29, 7
    %v31 = vsub.s32 0, %v30
    %v32 = vrot.slane %v27, %v31
    %vm34 = vcmask 261120
    %v36 = vsel %vm34, %v15, 0
    %v39 = vsel %vm34, %v16, 0
    %v42 = vsel %vm34, %v17, 0
    %v45 = vsel %vm34, %v18, 0
    %v48 = vsel %vm34, %v19, 0
    %v51 = vsel %vm34, %v20, 0
    %v54 = vsel %vm34, %v21, 0
    %v57 = vsel %vm34, %v22, 0
    %59 = vmatprep.subr.mxu0 0.0
    %60 = vmatpush1.msra.mxu0 0.0
    %61 = vmatprep.subr.mxu0 0.0
    %62 = vmatpush1.msra.mxu0 0.0
    %63 = vmatprep.subr.mxu0 0.0
    %64 = vmatpush1.msra.mxu0 0.0
    %65 = vmatprep.subr.mxu0 0.0
    %66 = vmatpush1.msra.mxu0 0.0
    %67 = vmatprep.subr.mxu0 0.0
    %68 = vmatpush1.msra.mxu0 0.0
    %69 = vmatprep.subr.mxu0 0.0
    %70 = vmatpush1.msra.mxu0 0.0
    %71 = vmatprep.subr.mxu0 0.0
    %72 = vmatpush1.msra.mxu0 0.0
    %73 = vmatprep.subr.mxu0 0.0
    %74 = vmatpush1.msra.mxu0 0.0
    %75 = vmatprep.subr.mxu0 0.0
    %76 = vmatpush1.msra.mxu0 0.0
    %77 = vmatprep.subr.mxu0 0.0
    %78 = vmatpush1.msra.mxu0 0.0
    %79 = vmatprep.subr.mxu0 0.0
    %80 = vmatpush1.msra.mxu0 0.0
    %81 = vmatprep.subr.mxu0 0.0
    %82 = vmatpush1.msra.mxu0 0.0
    %83 = vmatprep.subr.mxu0 0.0
    %84 = vmatpush1.msra.mxu0 %v26
    %85 = vmatprep.subr.mxu0 0.0
    %86 = vmatpush1.msra.mxu0 %v25
    %87 = vmatprep.subr.mxu0 0.0
    %88 = vmatpush1.msra.mxu0 %v24
    %89 = vmatprep.subr.mxu0 0.0
    %90 = vmatpush1.msra.mxu0 %v23
    %91 = vmatprep.subr.mxu0 0.0
    %92 = vmatpush2.msra.mxu0 0.0
    %93 = vmatprep.subr.mxu0 0.0
    %94 = vmatpush2.msra.mxu0 0.0
    %95 = vmatprep.subr.mxu0 0.0
    %96 = vmatpush2.msra.mxu0 0.0
    %97 = vmatprep.subr.mxu0 0.0
    %98 = vmatpush2.msra.mxu0 0.0
    %99 = vmatprep.subr.mxu0 0.0
    %100 = vmatpush2.msra.mxu0 0.0
    %101 = vmatprep.subr.mxu0 0.0
    %102 = vmatpush2.msra.mxu0 0.0
    %103 = vmatprep.subr.mxu0 0.0
    %104 = vmatpush2.msra.mxu0 0.0
    %105 = vmatprep.subr.mxu0 0.0
    %106 = vmatpush2.msra.mxu0 0.0
    %107 = vmatprep.subr.mxu0 0.0
    %108 = vmatpush2.msra.mxu0 0.0
    %109 = vmatprep.subr.mxu0 0.0
    %110 = vmatpush2.msra.mxu0 0.0
    %111 = vmatprep.subr.mxu0 0.0
    %112 = vmatpush2.msra.mxu0 0.0
    %113 = vmatprep.subr.mxu0 0.0
    %114 = vmatpush2.msra.mxu0 0.0
    %115 = vmatprep.subr.mxu0 0.0
    %116 = vmatpush2.msra.mxu0 0.0
    %117 = vmatprep.subr.mxu0 0.0
    %118 = vmatpush2.msra.mxu0 0.0
    %119 = vmatprep.subr.mxu0 0.0
    %120 = vmatpush2.msra.mxu0 0.0
    %121 = vmatprep.subr.mxu0 0.0
    %122 = vmatpush2.msra.mxu0 0.0
    %123 = vmatprep.mubr.f32.mxu0 0.0
    %124 = vmatmul.mubr.f32.gmra.mxu0 %v36
    %v125 = vpop.f32.mrf.mxu0
    %v126 = vadd.f32 %v32, %v125
    %v127 = vpop.f32.mrf.mxu0
    %128 = vmatprep.mubr.f32.mxu0 0.0
    %129 = vmatmul.mubr.f32.gmra.mxu0 %v39
    %v130 = vpop.f32.mrf.mxu0
    %v131 = vadd.f32 %v32, %v130
    %v132 = vpop.f32.mrf.mxu0
    %133 = vmatprep.mubr.f32.mxu0 0.0
    %134 = vmatmul.mubr.f32.gmra.mxu0 %v42
    %v135 = vpop.f32.mrf.mxu0
    %v136 = vadd.f32 %v32, %v135
    %v137 = vpop.f32.mrf.mxu0
    %138 = vmatprep.mubr.f32.mxu0 0.0
    %139 = vmatmul.mubr.f32.gmra.mxu0 %v45
    %v140 = vpop.f32.mrf.mxu0
    %v141 = vadd.f32 %v32, %v140
    %v142 = vpop.f32.mrf.mxu0
    %143 = vmatprep.mubr.f32.mxu0 0.0
    %144 = vmatmul.mubr.f32.gmra.mxu0 %v48
    %v145 = vpop.f32.mrf.mxu0
    %v146 = vadd.f32 %v32, %v145
    %v147 = vpop.f32.mrf.mxu0
    %148 = vmatprep.mubr.f32.mxu0 0.0
    %149 = vmatmul.mubr.f32.gmra.mxu0 %v51
    %v150 = vpop.f32.mrf.mxu0
    %v151 = vadd.f32 %v32, %v150
    %v152 = vpop.f32.mrf.mxu0
    %153 = vmatprep.mubr.f32.mxu0 0.0
    %154 = vmatmul.mubr.f32.gmra.mxu0 %v54
    %v155 = vpop.f32.mrf.mxu0
    %v156 = vadd.f32 %v32, %v155
    %v157 = vpop.f32.mrf.mxu0
    %158 = vmatprep.mubr.f32.mxu0 0.0
    %159 = vmatmul.mubr.f32.gmra.mxu0 %v57
    %v160 = vpop.f32.mrf.mxu0
    %v161 = vadd.f32 %v32, %v160
    %v162 = vpop.f32.mrf.mxu0
    %163 = vdwg.mxu0
    %v164 = vmul.f32 %v126, 32.0
    %v165 = vmul.f32 %v131, 32.0
    %v166 = vmul.f32 %v136, 32.0
    %v167 = vmul.f32 %v141, 32.0
    %v168 = vmul.f32 %v146, 32.0
    %v169 = vmul.f32 %v151, 32.0
    %v170 = vmul.f32 %v156, 32.0
    %v171 = vmul.f32 %v161, 32.0
    %v172 = vround.ne.pseudo %v164
    %v173 = vround.ne.pseudo %v165
    %v174 = vround.ne.pseudo %v166
    %v175 = vround.ne.pseudo %v167
    %v176 = vround.ne.pseudo %v168
    %v177 = vround.ne.pseudo %v169
    %v178 = vround.ne.pseudo %v170
    %v179 = vround.ne.pseudo %v171
    %v180 = vmax.f32 %v172, -128.0
    %v181 = vmax.f32 %v173, -128.0
    %v182 = vmax.f32 %v174, -128.0
    %v183 = vmax.f32 %v175, -128.0
    %v184 = vmax.f32 %v176, -128.0
    %v185 = vmax.f32 %v177, -128.0
    %v186 = vmax.f32 %v178, -128.0
    %v187 = vmax.f32 %v179, -128.0
    %v188 = vmin.f32 %v180, 127.0
    %v189 = vmin.f32 %v181, 127.0
    %v190 = vmin.f32 %v182, 127.0
    %v191 = vmin.f32 %v183, 127.0
    %v192 = vmin.f32 %v184, 127.0
    %v193 = vmin.f32 %v185, 127.0
    %v194 = vmin.f32 %v186, 127.0
    %v195 = vmin.f32 %v187, 127.0
    %v196 = vmul.f32 %v188, 0.03125
    %v197 = vmul.f32 %v189, 0.03125
    %v198 = vmul.f32 %v190, 0.03125
    %v199 = vmul.f32 %v191, 0.03125
    %v200 = vmul.f32 %v192, 0.03125
    %v201 = vmul.f32 %v193, 0.03125
    %v202 = vmul.f32 %v194, 0.03125
    %v203 = vmul.f32 %v195, 0.03125
    %204 = vst [vmem:[#allocation2] sm:$0xff] %v196
    %205 = vst [vmem:[#allocation2 + $0x8] sm:$0xff] %v197
    %206 = vst [vmem:[#allocation2 + $0x10] sm:$0xff] %v198
    %207 = vst [vmem:[#allocation2 + $0x18] sm:$0xff] %v199
    %208 = vst [vmem:[#allocation2 + $0x20] sm:$0xff] %v200
    %209 = vst [vmem:[#allocation2 + $0x28] sm:$0xff] %v201
    %210 = vst [vmem:[#allocation2 + $0x30] sm:$0xff] %v202
    %211 = vst [vmem:[#allocation2 + $0x38] sm:$0xff] %v203
    // Predicated region
    $region14: #{tpu_custom_call.1} parent=1 // pred_check
      _
    $region15: #{tpu_custom_call.1} parent=1 // pred_check_branch
      %213 = sbr.rel (0) target = $region17
    $region16: #{tpu_custom_call.1} parent=1 // pred_region
      %s215 = ssub.s32 1024, 1024
      %216 = vsyncadd [#allocation3], %s215
      %s217 = sshll.u32 [#allocation2], 4
      %s218 = int_to_ptr.vmem [resolvable:$true] %s217
      %223 = dma.vmem_to_hbm [thread:$0]  %s218, 1024, %s3, [#allocation3], 128, 128, 8
    $region17: #{tpu_custom_call.1} parent=1 // pred_fallthru
      _
    // Predicated region
    $region18: #{tpu_custom_call.1} parent=1 // pred_check
      _
    $region19: #{tpu_custom_call.1} parent=1 // pred_check_branch
      %225 = sbr.rel (0) target = $region21
    $region20: #{tpu_custom_call.1} parent=1 // pred_region
      %226 = dma.done [#allocation3], 1024
    $region21: #{tpu_custom_call.1} parent=1 // pred_fallthru
      _
    %227 = vsyncpa [#allocation3], 1

</llo_original>
